<compile_context>
chip_gen: v7x
topology: tpu7x:2x2x1
jax: 0.10.0
libtpu: 0.0.40
codegen_flags: <defaults>
</compile_context>

<pallas_src>
import functools

import jax
import jax.numpy as jnp
import numpy as np
from jax.experimental import pallas as pl
from jax.experimental.pallas import tpu as pltpu


def _round_up(x, m):
    return ((x + m - 1) // m) * m


# ----------------------------- Pallas kernel ------------------------------ #
def decoder_kernel(tok_ref, emb_ref, h_in_ref, c_in_ref, w_ref, fc_ref,
                   pred_ref, h_out_ref, c_out_ref,
                   *, n_layers, emb_dim, hid_dim, p_rows):
    B = h_in_ref.shape[1]
    H = hid_dim
    P = p_rows

    # ---- embedding lookup: SMEM token ids -> B dynamic VMEM row loads -------
    x = jnp.concatenate(
        [emb_ref[pl.ds(tok_ref[b], 1), :] for b in range(B)], axis=0)   # (B,E)
    # dropout: eval-mode identity.

    # ---- n_layers LSTM cells, single time step, all VMEM-resident -----------
    for layer in range(n_layers):
        in_dim = emb_dim if layer == 0 else H
        h = h_in_ref[layer]                                   # (B, H)
        c = c_in_ref[layer]                                   # (B, H)
        w_l = w_ref[layer]                                    # (P + H + 1, 4H)
        gates = (jnp.dot(x, w_l[0:in_dim, :],
                         preferred_element_type=jnp.float32)
                 + jnp.dot(h, w_l[P:P + H, :],
                           preferred_element_type=jnp.float32)
                 + w_l[P + H:P + H + 1, :])                   # (B, 4H)

        # Full-vreg nonlinearities (4H = 128 lanes): 2 EUP pushes, then slice.
        s = jax.nn.sigmoid(gates)
        t = jnp.tanh(gates)
        i_g = s[:, 0 * H:1 * H]
        f_g = s[:, 1 * H:2 * H]
        o_g = s[:, 3 * H:4 * H]
        g_g = t[:, 2 * H:3 * H]

        c_new = f_g * c + i_g * g_g
        h_new = o_g * jnp.tanh(c_new)
        h_out_ref[layer] = h_new
        c_out_ref[layer] = c_new
        x = h_new        # inter-layer dropout: eval-mode identity

    # ---- fc_out projection into a lane-dense (128-padded) output ------------
    pred_ref[...] = (jnp.dot(x, fc_ref[0:H, :],
                             preferred_element_type=jnp.float32)
                     + fc_ref[H:H + 1, :])


# ------------------------------ wrapper ------------------------------------ #
def decoder_forward(tokens, hidden, cell, params, *, output_dim):
    """tokens: (B,) int32; hidden/cell: (L, B, H) f32.

    Returns (prediction (B, output_dim), hidden (L,B,H), cell (L,B,H)).
    """
    B = tokens.shape[0]
    L, _, H = hidden.shape
    E = params["emb"].shape[1]
    P = params["lstm_wb"].shape[1] - H - 1
    out_pad = params["fc_wb"].shape[1]

    vmem = pl.BlockSpec(memory_space=pltpu.MemorySpace.VMEM)
    smem = pl.BlockSpec(memory_space=pltpu.MemorySpace.SMEM)

    pred_pad, h_new, c_new = pl.pallas_call(
        functools.partial(decoder_kernel, n_layers=L, emb_dim=E,
                          hid_dim=H, p_rows=P),
        out_shape=(
            jax.ShapeDtypeStruct((B, out_pad), jnp.float32),
            jax.ShapeDtypeStruct((L, B, H), jnp.float32),
            jax.ShapeDtypeStruct((L, B, H), jnp.float32),
        ),
        in_specs=[smem, vmem, vmem, vmem, vmem, vmem],
        out_specs=(vmem, vmem, vmem),
        # recurrent state updated in place: hidden -> h_out, cell -> c_out
        input_output_aliases={2: 1, 3: 2},
    )(tokens.astype(jnp.int32), params["emb"], hidden, cell,
      params["lstm_wb"], params["fc_wb"])

    return pred_pad[:, :output_dim], h_new, c_new


# ------------------------------ param init --------------------------------- #
def init_params(key, output_dim, emb_dim, hid_dim, n_layers):
    """PyTorch-style init; weights pre-transposed and packed.

    lstm_wb[l]: rows [0:P) = W_ih^T (zero-padded to P), [P:P+H) = W_hh^T,
                row P+H = b_ih + b_hh.          shape (L, P + H + 1, 4H)
    fc_wb:      rows [0:H) = fc_w^T, row H = fc_b, columns zero-padded to a
                multiple of 128.                shape (H + 1, out_pad)
    NOTE: keep f32 at these toy sizes; store weights in bf16 (math still f32
    via preferred_element_type) only when H / output_dim are scaled up.
    """
    H = hid_dim
    P = _round_up(max(emb_dim, hid_dim), 8)
    rows = P + H + 1
    out_pad = _round_up(output_dim, 128)

    keys = jax.random.split(key, 1 + 4 * n_layers + 2)
    # nn.Embedding default: N(0, 1)
    emb = jax.random.normal(keys[0], (output_dim, emb_dim), dtype=jnp.float32)

    bound = 1.0 / np.sqrt(H)
    blocks = []
    k = 1
    for layer in range(n_layers):
        in_dim = emb_dim if layer == 0 else H
        w_ih = jax.random.uniform(keys[k], (4 * H, in_dim), minval=-bound,
                                  maxval=bound, dtype=jnp.float32); k += 1
        w_hh = jax.random.uniform(keys[k], (4 * H, H), minval=-bound,
                                  maxval=bound, dtype=jnp.float32); k += 1
        b_ih = jax.random.uniform(keys[k], (4 * H,), minval=-bound,
                                  maxval=bound, dtype=jnp.float32); k += 1
        b_hh = jax.random.uniform(keys[k], (4 * H,), minval=-bound,
                                  maxval=bound, dtype=jnp.float32); k += 1
        blk = jnp.zeros((rows, 4 * H), jnp.float32)
        blk = blk.at[0:in_dim, :].set(w_ih.T)
        blk = blk.at[P:P + H, :].set(w_hh.T)
        blk = blk.at[P + H, :].set(b_ih + b_hh)
        blocks.append(blk)
    lstm_wb = jnp.stack(blocks, axis=0)                       # (L, rows, 4H)

    fb = 1.0 / np.sqrt(H)
    fc_w = jax.random.uniform(keys[k], (output_dim, H), minval=-fb,
                              maxval=fb, dtype=jnp.float32); k += 1
    fc_b = jax.random.uniform(keys[k], (output_dim,), minval=-fb,
                              maxval=fb, dtype=jnp.float32)
    fc_wb = jnp.zeros((H + 1, out_pad), jnp.float32)
    fc_wb = fc_wb.at[0:H, 0:output_dim].set(fc_w.T)
    fc_wb = fc_wb.at[H, 0:output_dim].set(fc_b)

    return {"emb": emb, "lstm_wb": lstm_wb, "fc_wb": fc_wb}


# --------------------------- pure-JAX reference ----------------------------- #
def decoder_forward_ref(tokens, hidden, cell, params, *, output_dim):
    L, _, H = hidden.shape
    E = params["emb"].shape[1]
    P = params["lstm_wb"].shape[1] - H - 1
    x = params["emb"][tokens]                                 # (B, E)
    hs, cs = [], []
    for layer in range(L):
        in_dim = E if layer == 0 else H
        wb = params["lstm_wb"][layer]
        gates = x @ wb[0:in_dim] + hidden[layer] @ wb[P:P + H] + wb[P + H]
        i = jax.nn.sigmoid(gates[:, :H])
        f = jax.nn.sigmoid(gates[:, H:2 * H])
        g = jnp.tanh(gates[:, 2 * H:3 * H])
        o = jax.nn.sigmoid(gates[:, 3 * H:])
        c2 = f * cell[layer] + i * g
        h2 = o * jnp.tanh(c2)
        hs.append(h2)
        cs.append(c2)
        x = h2
    fc = params["fc_wb"]
    pred = x @ fc[0:H, 0:output_dim] + fc[H, 0:output_dim]
    return pred, jnp.stack(hs, 0), jnp.stack(cs, 0)


# ---------------------------------- main ------------------------------------ #
if __name__ == "__main__":
    OUTPUT_DIM = 50   # vocab size
    EMB_DIM = 32
    HID_DIM = 32
    N_LAYERS = 2
    BATCH = 2

    key = jax.random.PRNGKey(0)
    k_par, k_tok, k_h, k_c = jax.random.split(key, 4)
    params = init_params(k_par, OUTPUT_DIM, EMB_DIM, HID_DIM, N_LAYERS)
    tokens = jax.random.randint(k_tok, (BATCH,), 0, OUTPUT_DIM, dtype=jnp.int32)
    hidden = jax.random.normal(k_h, (N_LAYERS, BATCH, HID_DIM),
                               dtype=jnp.float32)
    cell = jax.random.normal(k_c, (N_LAYERS, BATCH, HID_DIM),
                             dtype=jnp.float32)

    # Reference first (the kernel aliases hidden/cell into its outputs).
    pred_ref, h_ref, c_ref = decoder_forward_ref(
        tokens, hidden, cell, params, output_dim=OUTPUT_DIM)

    fwd = jax.jit(decoder_forward, static_argnames=("output_dim",))
    pred, h_new, c_new = fwd(tokens, hidden, cell, params,
                             output_dim=OUTPUT_DIM)
    pred, h_new, c_new = jax.block_until_ready((pred, h_new, c_new))

    np.testing.assert_allclose(np.asarray(pred), np.asarray(pred_ref),
                               rtol=1e-5, atol=1e-5)
    np.testing.assert_allclose(np.asarray(h_new), np.asarray(h_ref),
                               rtol=1e-5, atol=1e-5)
    np.testing.assert_allclose(np.asarray(c_new), np.asarray(c_ref),
                               rtol=1e-5, atol=1e-5)

    assert pred.shape == (BATCH, OUTPUT_DIM)
    assert h_new.shape == (N_LAYERS, BATCH, HID_DIM)
    assert c_new.shape == (N_LAYERS, BATCH, HID_DIM)
    print("KERNEL_OK")
</pallas_src>

<mosaic_0001>
module attributes {stable_mosaic.version = 11 : i64} {
  func.func @decoder_kernel(%arg0: memref<2xi32, #tpu.memory_space<smem>>, %arg1: memref<50x32xf32, #tpu.memory_space<vmem>>, %arg2: memref<2x2x32xf32, #tpu.memory_space<vmem>>, %arg3: memref<2x2x32xf32, #tpu.memory_space<vmem>>, %arg4: memref<2x65x128xf32, #tpu.memory_space<vmem>>, %arg5: memref<33x128xf32, #tpu.memory_space<vmem>>, %arg6: memref<2x128xf32, #tpu.memory_space<vmem>>, %arg7: memref<2x2x32xf32, #tpu.memory_space<vmem>>, %arg8: memref<2x2x32xf32, #tpu.memory_space<vmem>>) attributes {dimension_semantics = [], scalar_prefetch = 0 : i64, scratch_operands = 0 : i64, tpu.core_type = #tpu.core_type<tc>} {
    %c0 = arith.constant 0 : index
    %0 = memref.load %arg0[%c0] : memref<2xi32, #tpu.memory_space<smem>>
    %1 = arith.index_cast %0 : i32 to index
    %c0_0 = arith.constant 0 : index
    %2 = vector.load %arg1[%1, %c0_0] : memref<50x32xf32, #tpu.memory_space<vmem>>, vector<1x32xf32>
    %c1 = arith.constant 1 : index
    %3 = memref.load %arg0[%c1] : memref<2xi32, #tpu.memory_space<smem>>
    %4 = arith.index_cast %3 : i32 to index
    %c0_1 = arith.constant 0 : index
    %5 = vector.load %arg1[%4, %c0_1] : memref<50x32xf32, #tpu.memory_space<vmem>>, vector<1x32xf32>
    %6 = tpu.concatenate %2, %5 in 0 : vector<1x32xf32>, vector<1x32xf32> -> vector<2x32xf32>
    %c0_2 = arith.constant 0 : index
    %c0_3 = arith.constant 0 : index
    %c0_4 = arith.constant 0 : index
    %7 = vector.load %arg2[%c0_2, %c0_3, %c0_4] : memref<2x2x32xf32, #tpu.memory_space<vmem>>, vector<1x2x32xf32>
    %8 = vector.shape_cast %7 : vector<1x2x32xf32> to vector<2x32xf32>
    %c0_5 = arith.constant 0 : index
    %c0_6 = arith.constant 0 : index
    %c0_7 = arith.constant 0 : index
    %9 = vector.load %arg3[%c0_5, %c0_6, %c0_7] : memref<2x2x32xf32, #tpu.memory_space<vmem>>, vector<1x2x32xf32>
    %10 = vector.shape_cast %9 : vector<1x2x32xf32> to vector<2x32xf32>
    %c0_8 = arith.constant 0 : index
    %c0_9 = arith.constant 0 : index
    %c0_10 = arith.constant 0 : index
    %11 = vector.load %arg4[%c0_8, %c0_9, %c0_10] : memref<2x65x128xf32, #tpu.memory_space<vmem>>, vector<1x65x128xf32>
    %12 = vector.shape_cast %11 : vector<1x65x128xf32> to vector<65x128xf32>
    %13 = vector.extract_strided_slice %12 {offsets = [0, 0], sizes = [32, 128], strides = [1, 1]} : vector<65x128xf32> to vector<32x128xf32>
    %cst = arith.constant dense<0.000000e+00> : vector<2x128xf32>
    %14 = tpu.matmul %6, %13, %cst {dimension_numbers = #tpu.dot_dimension_numbers<[1], [0], [0], [1], [0, 0, 1, 1], [], []>} : vector<2x32xf32>, vector<32x128xf32>, vector<2x128xf32> -> vector<2x128xf32>
    %15 = vector.extract_strided_slice %12 {offsets = [32, 0], sizes = [32, 128], strides = [1, 1]} : vector<65x128xf32> to vector<32x128xf32>
    %cst_11 = arith.constant dense<0.000000e+00> : vector<2x128xf32>
    %16 = tpu.matmul %8, %15, %cst_11 {dimension_numbers = #tpu.dot_dimension_numbers<[1], [0], [0], [1], [0, 0, 1, 1], [], []>} : vector<2x32xf32>, vector<32x128xf32>, vector<2x128xf32> -> vector<2x128xf32>
    %17 = arith.addf %14, %16 : vector<2x128xf32>
    %18 = vector.extract_strided_slice %12 {offsets = [64, 0], sizes = [1, 128], strides = [1, 1]} : vector<65x128xf32> to vector<1x128xf32>
    %19 = vector.broadcast %18 : vector<1x128xf32> to vector<2x128xf32>
    %20 = arith.addf %17, %19 : vector<2x128xf32>
    %21 = arith.negf %20 : vector<2x128xf32>
    %22 = math.exp %21 : vector<2x128xf32>
    %cst_12 = arith.constant 1.000000e+00 : f32
    %23 = vector.broadcast %cst_12 : f32 to vector<2x128xf32>
    %24 = arith.addf %23, %22 : vector<2x128xf32>
    %25 = arith.divf %23, %24 : vector<2x128xf32>
    %26 = math.tanh %20 : vector<2x128xf32>
    %27 = vector.extract_strided_slice %25 {offsets = [0, 0], sizes = [2, 32], strides = [1, 1]} : vector<2x128xf32> to vector<2x32xf32>
    %28 = vector.extract_strided_slice %25 {offsets = [0, 32], sizes = [2, 32], strides = [1, 1]} : vector<2x128xf32> to vector<2x32xf32>
    %29 = vector.extract_strided_slice %25 {offsets = [0, 96], sizes = [2, 32], strides = [1, 1]} : vector<2x128xf32> to vector<2x32xf32>
    %30 = vector.extract_strided_slice %26 {offsets = [0, 64], sizes = [2, 32], strides = [1, 1]} : vector<2x128xf32> to vector<2x32xf32>
    %31 = arith.mulf %28, %10 : vector<2x32xf32>
    %32 = arith.mulf %27, %30 : vector<2x32xf32>
    %33 = arith.addf %31, %32 : vector<2x32xf32>
    %34 = math.tanh %33 : vector<2x32xf32>
    %35 = arith.mulf %29, %34 : vector<2x32xf32>
    %c0_13 = arith.constant 0 : index
    %c0_14 = arith.constant 0 : index
    %c0_15 = arith.constant 0 : index
    %36 = vector.load %arg7[%c0_13, %c0_14, %c0_15] : memref<2x2x32xf32, #tpu.memory_space<vmem>>, vector<1x2x32xf32>
    %37 = vector.shape_cast %36 : vector<1x2x32xf32> to vector<2x32xf32>
    %38 = vector.shape_cast %35 : vector<2x32xf32> to vector<1x2x32xf32>
    tpu.vector_store %arg7[%c0_13, %c0_14, %c0_15], %38 {strides = array<i32>} : memref<2x2x32xf32, #tpu.memory_space<vmem>>, vector<1x2x32xf32>,
    %c0_16 = arith.constant 0 : index
    %c0_17 = arith.constant 0 : index
    %c0_18 = arith.constant 0 : index
    %39 = vector.load %arg8[%c0_16, %c0_17, %c0_18] : memref<2x2x32xf32, #tpu.memory_space<vmem>>, vector<1x2x32xf32>
    %40 = vector.shape_cast %39 : vector<1x2x32xf32> to vector<2x32xf32>
    %41 = vector.shape_cast %33 : vector<2x32xf32> to vector<1x2x32xf32>
    tpu.vector_store %arg8[%c0_16, %c0_17, %c0_18], %41 {strides = array<i32>} : memref<2x2x32xf32, #tpu.memory_space<vmem>>, vector<1x2x32xf32>,
    %c1_19 = arith.constant 1 : index
    %c0_20 = arith.constant 0 : index
    %c0_21 = arith.constant 0 : index
    %42 = vector.load %arg2[%c1_19, %c0_20, %c0_21] : memref<2x2x32xf32, #tpu.memory_space<vmem>>, vector<1x2x32xf32>
    %43 = vector.shape_cast %42 : vector<1x2x32xf32> to vector<2x32xf32>
    %c1_22 = arith.constant 1 : index
    %c0_23 = arith.constant 0 : index
    %c0_24 = arith.constant 0 : index
    %44 = vector.load %arg3[%c1_22, %c0_23, %c0_24] : memref<2x2x32xf32, #tpu.memory_space<vmem>>, vector<1x2x32xf32>
    %45 = vector.shape_cast %44 : vector<1x2x32xf32> to vector<2x32xf32>
    %c1_25 = arith.constant 1 : index
    %c0_26 = arith.constant 0 : index
    %c0_27 = arith.constant 0 : index
    %46 = vector.load %arg4[%c1_25, %c0_26, %c0_27] : memref<2x65x128xf32, #tpu.memory_space<vmem>>, vector<1x65x128xf32>
    %47 = vector.shape_cast %46 : vector<1x65x128xf32> to vector<65x128xf32>
    %48 = vector.extract_strided_slice %47 {offsets = [0, 0], sizes = [32, 128], strides = [1, 1]} : vector<65x128xf32> to vector<32x128xf32>
    %cst_28 = arith.constant dense<0.000000e+00> : vector<2x128xf32>
    %49 = tpu.matmul %35, %48, %cst_28 {dimension_numbers = #tpu.dot_dimension_numbers<[1], [0], [0], [1], [0, 0, 1, 1], [], []>} : vector<2x32xf32>, vector<32x128xf32>, vector<2x128xf32> -> vector<2x128xf32>
    %50 = vector.extract_strided_slice %47 {offsets = [32, 0], sizes = [32, 128], strides = [1, 1]} : vector<65x128xf32> to vector<32x128xf32>
    %cst_29 = arith.constant dense<0.000000e+00> : vector<2x128xf32>
    %51 = tpu.matmul %43, %50, %cst_29 {dimension_numbers = #tpu.dot_dimension_numbers<[1], [0], [0], [1], [0, 0, 1, 1], [], []>} : vector<2x32xf32>, vector<32x128xf32>, vector<2x128xf32> -> vector<2x128xf32>
    %52 = arith.addf %49, %51 : vector<2x128xf32>
    %53 = vector.extract_strided_slice %47 {offsets = [64, 0], sizes = [1, 128], strides = [1, 1]} : vector<65x128xf32> to vector<1x128xf32>
    %54 = vector.broadcast %53 : vector<1x128xf32> to vector<2x128xf32>
    %55 = arith.addf %52, %54 : vector<2x128xf32>
    %56 = arith.negf %55 : vector<2x128xf32>
    %57 = math.exp %56 : vector<2x128xf32>
    %cst_30 = arith.constant 1.000000e+00 : f32
    %58 = vector.broadcast %cst_30 : f32 to vector<2x128xf32>
    %59 = arith.addf %58, %57 : vector<2x128xf32>
    %60 = arith.divf %58, %59 : vector<2x128xf32>
    %61 = math.tanh %55 : vector<2x128xf32>
    %62 = vector.extract_strided_slice %60 {offsets = [0, 0], sizes = [2, 32], strides = [1, 1]} : vector<2x128xf32> to vector<2x32xf32>
    %63 = vector.extract_strided_slice %60 {offsets = [0, 32], sizes = [2, 32], strides = [1, 1]} : vector<2x128xf32> to vector<2x32xf32>
    %64 = vector.extract_strided_slice %60 {offsets = [0, 96], sizes = [2, 32], strides = [1, 1]} : vector<2x128xf32> to vector<2x32xf32>
    %65 = vector.extract_strided_slice %61 {offsets = [0, 64], sizes = [2, 32], strides = [1, 1]} : vector<2x128xf32> to vector<2x32xf32>
    %66 = arith.mulf %63, %45 : vector<2x32xf32>
    %67 = arith.mulf %62, %65 : vector<2x32xf32>
    %68 = arith.addf %66, %67 : vector<2x32xf32>
    %69 = math.tanh %68 : vector<2x32xf32>
    %70 = arith.mulf %64, %69 : vector<2x32xf32>
    %c1_31 = arith.constant 1 : index
    %c0_32 = arith.constant 0 : index
    %c0_33 = arith.constant 0 : index
    %71 = vector.load %arg7[%c1_31, %c0_32, %c0_33] : memref<2x2x32xf32, #tpu.memory_space<vmem>>, vector<1x2x32xf32>
    %72 = vector.shape_cast %71 : vector<1x2x32xf32> to vector<2x32xf32>
    %73 = vector.shape_cast %70 : vector<2x32xf32> to vector<1x2x32xf32>
    tpu.vector_store %arg7[%c1_31, %c0_32, %c0_33], %73 {strides = array<i32>} : memref<2x2x32xf32, #tpu.memory_space<vmem>>, vector<1x2x32xf32>,
    %c1_34 = arith.constant 1 : index
    %c0_35 = arith.constant 0 : index
    %c0_36 = arith.constant 0 : index
    %74 = vector.load %arg8[%c1_34, %c0_35, %c0_36] : memref<2x2x32xf32, #tpu.memory_space<vmem>>, vector<1x2x32xf32>
    %75 = vector.shape_cast %74 : vector<1x2x32xf32> to vector<2x32xf32>
    %76 = vector.shape_cast %68 : vector<2x32xf32> to vector<1x2x32xf32>
    tpu.vector_store %arg8[%c1_34, %c0_35, %c0_36], %76 {strides = array<i32>} : memref<2x2x32xf32, #tpu.memory_space<vmem>>, vector<1x2x32xf32>,
    %c0_37 = arith.constant 0 : index
    %c0_38 = arith.constant 0 : index
    %77 = vector.load %arg5[%c0_37, %c0_38] : memref<33x128xf32, #tpu.memory_space<vmem>>, vector<32x128xf32>
    %cst_39 = arith.constant dense<0.000000e+00> : vector<2x128xf32>
    %78 = tpu.matmul %70, %77, %cst_39 {dimension_numbers = #tpu.dot_dimension_numbers<[1], [0], [0], [1], [0, 0, 1, 1], [], []>} : vector<2x32xf32>, vector<32x128xf32>, vector<2x128xf32> -> vector<2x128xf32>
    %c32 = arith.constant 32 : index
    %c0_40 = arith.constant 0 : index
    %79 = vector.load %arg5[%c32, %c0_40] : memref<33x128xf32, #tpu.memory_space<vmem>>, vector<1x128xf32>
    %80 = vector.broadcast %79 : vector<1x128xf32> to vector<2x128xf32>
    %81 = arith.addf %78, %80 : vector<2x128xf32>
    %c0_41 = arith.constant 0 : index
    %c0_42 = arith.constant 0 : index
    %82 = vector.load %arg6[%c0_41, %c0_42] : memref<2x128xf32, #tpu.memory_space<vmem>>, vector<2x128xf32>
    tpu.vector_store %arg6[%c0_41, %c0_42], %81 {strides = array<i32>} : memref<2x128xf32, #tpu.memory_space<vmem>>, vector<2x128xf32>,
    return
  }
}

</mosaic_0001>

<llo_original>
// kernel: decoder_forward.1
$region0: #{decoder_forward.1}
  #allocation0 [shape = 'u32[]', space=smem, size = 0x4, offset = 0x4, fixed_abs, tag = 'smem constant byte address 0x4 - core index']
  #allocation1 [shape = 'u32[144,128]{1,0:T(1,128)}', space=vmem, size = 0x12000, scoped, tag = 'internal scratch']
  %s0 = inlined_call_operand.vmem [shape: s32[2], index: 0, kind: input, shape index: {}]
  %s1 = inlined_call_operand.vmem [shape: f32[50,32], index: 1, kind: input, shape index: {}]
  %s2 = inlined_call_operand.vmem [shape: f32[2,2,32], index: 2, kind: input, shape index: {}, may-alias: {2,7}]
  %s3 = inlined_call_operand.vmem [shape: f32[2,2,32], index: 3, kind: input, shape index: {}, may-alias: {3,8}]
  %s4 = inlined_call_operand.vmem [shape: f32[2,65,128], index: 4, kind: input, shape index: {}]
  %s5 = inlined_call_operand.vmem [shape: f32[33,128], index: 5, kind: input, shape index: {}]
  %s6 = inlined_call_operand.hbm [shape: f32[2,128], index: 6, kind: output, shape index: {0}]
  %s7 = inlined_call_operand.vmem [shape: f32[2,2,32], index: 7, kind: output, shape index: {1}, may-alias: {2,7}]
  %s8 = inlined_call_operand.vmem [shape: f32[2,2,32], index: 8, kind: output, shape index: {2}, may-alias: {3,8}]
  %9 = xla_tuple %s6, %s7, %s8
  %s10 = sld [smem:[#allocation0]]
  $region54: #{decoder_forward.1} parent=0
    _
  %s12 = ssub.s32 1, %s10
  %s13 = scalar_select 0, %s12, %s10
  $region1: #{decoder_forward.1} parent=0
    #allocation2 [shape = 'u8[512]{0}', space=smem, size = 0x200, scoped, tag = 'input window, operand 0, single buffered']
    #allocation3 [shape = 's32[1]{0}', space=sflag, size = 0x4, scoped, tag = 'scoped memory for decoder_forward.1']
    #allocation4 [shape = 's32[1]{0}', space=sflag, size = 0x4, scoped, tag = 'scoped memory for decoder_forward.1']
    #allocation5 [shape = 'u8[1024]{0}', space=vmem, size = 0x400, scoped, tag = 'output window, operand 0, single buffered']
    %14 = vsyncpa [#allocation4], 0
    %15 = vsyncpa [#allocation3], 0
    // Predicated region
    $region2: #{decoder_forward.1} parent=1 // pred_check
      _
    $region3: #{decoder_forward.1} parent=1 // pred_check_branch
      %17 = sbr.rel (0) target = $region5
    $region4: #{decoder_forward.1} parent=1 // pred_region
      %s19 = ssub.s32 16, 16
      %20 = vsyncadd [#allocation4], %s19
      %s22 = sshll.u32 %s0, 4
      %s23 = int_to_ptr.vmem [resolvable:$true] %s22
      %25 = dma.vmem_to_smem %s23, 16, [#allocation2], [#allocation4]
    $region5: #{decoder_forward.1} parent=1 // pred_fallthru
      _
    // Predicated region
    $region6: #{decoder_forward.1} parent=1 // pred_check
      _
    $region7: #{decoder_forward.1} parent=1 // pred_check_branch
      %27 = sbr.rel (0) target = $region9
    $region8: #{decoder_forward.1} parent=1 // pred_region
      _
    $region9: #{decoder_forward.1} parent=1 // pred_fallthru
      _
    // Predicated region
    $region10: #{decoder_forward.1} parent=1 // pred_check
      _
    $region11: #{decoder_forward.1} parent=1 // pred_check_branch
      %29 = sbr.rel (0) target = $region13
    $region12: #{decoder_forward.1} parent=1 // pred_region
      _
    $region13: #{decoder_forward.1} parent=1 // pred_fallthru
      _
    // Predicated region
    $region14: #{decoder_forward.1} parent=1 // pred_check
      _
    $region15: #{decoder_forward.1} parent=1 // pred_check_branch
      %31 = sbr.rel (0) target = $region17
    $region16: #{decoder_forward.1} parent=1 // pred_region
      _
    $region17: #{decoder_forward.1} parent=1 // pred_fallthru
      _
    // Predicated region
    $region18: #{decoder_forward.1} parent=1 // pred_check
      _
    $region19: #{decoder_forward.1} parent=1 // pred_check_branch
      %33 = sbr.rel (0) target = $region21
    $region20: #{decoder_forward.1} parent=1 // pred_region
      _
    $region21: #{decoder_forward.1} parent=1 // pred_fallthru
      _
    // Predicated region
    $region22: #{decoder_forward.1} parent=1 // pred_check
      _
    $region23: #{decoder_forward.1} parent=1 // pred_check_branch
      %35 = sbr.rel (0) target = $region25
    $region24: #{decoder_forward.1} parent=1 // pred_region
      _
    $region25: #{decoder_forward.1} parent=1 // pred_fallthru
      _
    // Predicated region
    $region26: #{decoder_forward.1} parent=1 // pred_check
      _
    $region27: #{decoder_forward.1} parent=1 // pred_check_branch
      %37 = sbr.rel (0) target = $region29
    $region28: #{decoder_forward.1} parent=1 // pred_region
      %38 = dma.done [#allocation4], 16
    $region29: #{decoder_forward.1} parent=1 // pred_fallthru
      _
    %39 = sfence
    %s40 = sld [smem:[#allocation2]]
    %s41 = scalar_lea.vmem %s1, %s40
    %v42 = vld [vmem:[%s41] sm:$0x1]
    %s43 = sld [smem:[#allocation2 + $0x1]]
    %s44 = scalar_lea.vmem %s1, %s43
    %v45 = vld [vmem:[%s44] sm:$0x1]
    %v47 = vrot.slane %v45, 7
    %vm49 = vcmask 1040384
    %v50 = vsel %vm49, %v42, %v47
    %v51 = vld [vmem:[%s2] sm:$0x3]
    %v52 = vld [vmem:[%s3] sm:$0x3]
    %v53 = vld [vmem:[%s4] sm:$0xff]
    %v54 = vld [vmem:[%s4 + $0x8] sm:$0xff]
    %v55 = vld [vmem:[%s4 + $0x10] sm:$0xff]
    %v56 = vld [vmem:[%s4 + $0x18] sm:$0xff]
    %v57 = vld [vmem:[%s4 + $0x20] sm:$0xff]
    %v58 = vld [vmem:[%s4 + $0x28] sm:$0xff]
    %v59 = vld [vmem:[%s4 + $0x30] sm:$0xff]
    %v60 = vld [vmem:[%s4 + $0x38] sm:$0xff]
    %v61 = vld [vmem:[%s4 + $0x40] sm:$0x1]
    %vm62 = vcmask 261120
    %v64 = vsel %vm62, %v51, 0
    %66 = vmatprep.subr.mxu0 0.0
    %67 = vmatpush1.msra.mxu0 %v57
    %68 = vmatprep.subr.mxu0 0.0
    %69 = vmatpush1.msra.mxu0 %v58
    %70 = vmatprep.subr.mxu0 0.0
    %71 = vmatpush1.msra.mxu0 %v59
    %72 = vmatprep.subr.mxu0 0.0
    %73 = vmatpush1.msra.mxu0 %v60
    %74 = vmatprep.subr.mxu0 0.0
    %75 = vmatpush1.msra.mxu0 0.0
    %76 = vmatprep.subr.mxu0 0.0
    %77 = vmatpush1.msra.mxu0 0.0
    %78 = vmatprep.subr.mxu0 0.0
    %79 = vmatpush1.msra.mxu0 0.0
    %80 = vmatprep.subr.mxu0 0.0
    %81 = vmatpush1.msra.mxu0 0.0
    %82 = vmatprep.subr.mxu0 0.0
    %83 = vmatpush1.msra.mxu0 0.0
    %84 = vmatprep.subr.mxu0 0.0
    %85 = vmatpush1.msra.mxu0 0.0
    %86 = vmatprep.subr.mxu0 0.0
    %87 = vmatpush1.msra.mxu0 0.0
    %88 = vmatprep.subr.mxu0 0.0
    %89 = vmatpush1.msra.mxu0 0.0
    %90 = vmatprep.subr.mxu0 0.0
    %91 = vmatpush1.msra.mxu0 0.0
    %92 = vmatprep.subr.mxu0 0.0
    %93 = vmatpush1.msra.mxu0 0.0
    %94 = vmatprep.subr.mxu0 0.0
    %95 = vmatpush1.msra.mxu0 0.0
    %96 = vmatprep.subr.mxu0 0.0
    %97 = vmatpush1.msra.mxu0 0.0
    %98 = vmatprep.subr.mxu0 0.0
    %99 = vmatpush1.msra.mxu0 0.0
    %100 = vmatprep.subr.mxu0 0.0
    %101 = vmatpush1.msra.mxu0 0.0
    %102 = vmatprep.subr.mxu0 0.0
    %103 = vmatpush1.msra.mxu0 0.0
    %104 = vmatprep.subr.mxu0 0.0
    %105 = vmatpush1.msra.mxu0 0.0
    %106 = vmatprep.subr.mxu0 0.0
    %107 = vmatpush1.msra.mxu0 0.0
    %108 = vmatprep.subr.mxu0 0.0
    %109 = vmatpush1.msra.mxu0 0.0
    %110 = vmatprep.subr.mxu0 0.0
    %111 = vmatpush1.msra.mxu0 0.0
    %112 = vmatprep.subr.mxu0 0.0
    %113 = vmatpush1.msra.mxu0 0.0
    %114 = vmatprep.subr.mxu0 0.0
    %115 = vmatpush1.msra.mxu0 0.0
    %116 = vmatprep.subr.mxu0 0.0
    %117 = vmatpush1.msra.mxu0 0.0
    %118 = vmatprep.subr.mxu0 0.0
    %119 = vmatpush1.msra.mxu0 0.0
    %120 = vmatprep.subr.mxu0 0.0
    %121 = vmatpush1.msra.mxu0 0.0
    %122 = vmatprep.subr.mxu0 0.0
    %123 = vmatpush1.msra.mxu0 0.0
    %124 = vmatprep.subr.mxu0 0.0
    %125 = vmatpush1.msra.mxu0 0.0
    %126 = vmatprep.subr.mxu0 0.0
    %127 = vmatpush1.msra.mxu0 0.0
    %128 = vmatprep.subr.mxu0 0.0
    %129 = vmatpush1.msra.mxu0 0.0
    %130 = vmatprep.mubr.f32.mxu0 0.0
    %131 = vmatmul.mubr.f32.gmra.mrb[0].mxu0 %v64
    %v132 = vpop.f32.mrb[0].mxu0
    %v133 = vadd.f32 0.0, %v132
    %v134 = vpop.f32.mrb[0].mxu0
    %135 = vdwg.mxu0
    %v137 = vsel %vm62, %v50, 0
    %139 = vmatprep.subr.mxu0 0.0
    %140 = vmatpush1.msra.mxu0 %v53
    %141 = vmatprep.subr.mxu0 0.0
    %142 = vmatpush1.msra.mxu0 %v54
    %143 = vmatprep.subr.mxu0 0.0
    %144 = vmatpush1.msra.mxu0 %v55
    %145 = vmatprep.subr.mxu0 0.0
    %146 = vmatpush1.msra.mxu0 %v56
    %147 = vmatprep.subr.mxu0 0.0
    %148 = vmatpush1.msra.mxu0 0.0
    %149 = vmatprep.subr.mxu0 0.0
    %150 = vmatpush1.msra.mxu0 0.0
    %151 = vmatprep.subr.mxu0 0.0
    %152 = vmatpush1.msra.mxu0 0.0
    %153 = vmatprep.subr.mxu0 0.0
    %154 = vmatpush1.msra.mxu0 0.0
    %155 = vmatprep.subr.mxu0 0.0
    %156 = vmatpush1.msra.mxu0 0.0
    %157 = vmatprep.subr.mxu0 0.0
    %158 = vmatpush1.msra.mxu0 0.0
    %159 = vmatprep.subr.mxu0 0.0
    %160 = vmatpush1.msra.mxu0 0.0
    %161 = vmatprep.subr.mxu0 0.0
    %162 = vmatpush1.msra.mxu0 0.0
    %163 = vmatprep.subr.mxu0 0.0
    %164 = vmatpush1.msra.mxu0 0.0
    %165 = vmatprep.subr.mxu0 0.0
    %166 = vmatpush1.msra.mxu0 0.0
    %167 = vmatprep.subr.mxu0 0.0
    %168 = vmatpush1.msra.mxu0 0.0
    %169 = vmatprep.subr.mxu0 0.0
    %170 = vmatpush1.msra.mxu0 0.0
    %171 = vmatprep.subr.mxu0 0.0
    %172 = vmatpush1.msra.mxu0 0.0
    %173 = vmatprep.subr.mxu0 0.0
    %174 = vmatpush1.msra.mxu0 0.0
    %175 = vmatprep.subr.mxu0 0.0
    %176 = vmatpush1.msra.mxu0 0.0
    %177 = vmatprep.subr.mxu0 0.0
    %178 = vmatpush1.msra.mxu0 0.0
    %179 = vmatprep.subr.mxu0 0.0
    %180 = vmatpush1.msra.mxu0 0.0
    %181 = vmatprep.subr.mxu0 0.0
    %182 = vmatpush1.msra.mxu0 0.0
    %183 = vmatprep.subr.mxu0 0.0
    %184 = vmatpush1.msra.mxu0 0.0
    %185 = vmatprep.subr.mxu0 0.0
    %186 = vmatpush1.msra.mxu0 0.0
    %187 = vmatprep.subr.mxu0 0.0
    %188 = vmatpush1.msra.mxu0 0.0
    %189 = vmatprep.subr.mxu0 0.0
    %190 = vmatpush1.msra.mxu0 0.0
    %191 = vmatprep.subr.mxu0 0.0
    %192 = vmatpush1.msra.mxu0 0.0
    %193 = vmatprep.subr.mxu0 0.0
    %194 = vmatpush1.msra.mxu0 0.0
    %195 = vmatprep.subr.mxu0 0.0
    %196 = vmatpush1.msra.mxu0 0.0
    %197 = vmatprep.subr.mxu0 0.0
    %198 = vmatpush1.msra.mxu0 0.0
    %199 = vmatprep.subr.mxu0 0.0
    %200 = vmatpush1.msra.mxu0 0.0
    %201 = vmatprep.subr.mxu0 0.0
    %202 = vmatpush1.msra.mxu0 0.0
    %203 = vmatprep.mubr.f32.mxu0 0.0
    %204 = vmatmul.mubr.f32.gmra.mrb[0].mxu0 %v137
    %v205 = vpop.f32.mrb[0].mxu0
    %v206 = vadd.f32 %v133, %v205
    %v207 = vpop.f32.mrb[0].mxu0
    %208 = vdwg.mxu0
    %v209 = vlaneseq
    %v210 = vshrl.u32 %v209, 7
    %v211 = vsub.s32 0, %v210
    %v212 = vrot.slane %v61, %v211
    %v213 = vadd.f32 %v206, %v212
    %v214 = vxor.u32 %v213, 2147483648
    %v215 = vmul.f32 %v214, 1.442695
    %v216 = vpow.pop %v215
    %v217 = vadd.f32 %v216, 1.0
    %v218 = vrcp.pop %v217
    %v219 = vmul.f32 1.0, %v218
    %v220 = vtanh.pop %v213
    %222 = vrot.lane.b32.xlu0 %v52, 32
    %v223 = vpop.permute.xlu0 %222
    %v225 = vmul.f32 %v219, %v223
    %227 = vrot.lane.b32.xlu0 %v220, 64
    %v228 = vpop.permute.xlu0 %227
    %v230 = vmul.f32 %v219, %v228
    %232 = vrot.lane.b32.xlu0 %v230, 32
    %v233 = vpop.permute.xlu0 %232
    %v235 = vadd.f32 %v225, %v233
    %v236 = vtanh.pop %v235
    %238 = vrot.lane.b32.xlu0 %v236, 64
    %v239 = vpop.permute.xlu0 %238
    %v241 = vmul.f32 %v219, %v239
    %243 = vrot.lane.b32.xlu0 %v241, 32
    %v244 = vpop.permute.xlu0 %243
    %vm246 = vcmask 254976
    %247 = vst.msk [vmem:[%s7] sm:$0x3] %vm246, %v244
    %249 = vrot.lane.b32.xlu0 %v235, 96
    %v250 = vpop.permute.xlu0 %249
    %252 = vst.msk [vmem:[%s8] sm:$0x3] %vm246, %v250
    %s253 = scalar_lea.vmem %s2, 2
    %v254 = vld [vmem:[%s253] sm:$0x3]
    %s255 = scalar_lea.vmem %s3, 2
    %v256 = vld [vmem:[%s255] sm:$0x3]
    %s257 = scalar_lea.vmem %s4, 72
    %v258 = vld [vmem:[%s257] sm:$0xff]
    %v259 = vld [vmem:[%s257 + $0x8] sm:$0xff]
    %v260 = vld [vmem:[%s257 + $0x10] sm:$0xff]
    %v261 = vld [vmem:[%s257 + $0x18] sm:$0xff]
    %v262 = vld [vmem:[%s257 + $0x20] sm:$0xff]
    %v263 = vld [vmem:[%s257 + $0x28] sm:$0xff]
    %v264 = vld [vmem:[%s257 + $0x30] sm:$0xff]
    %v265 = vld [vmem:[%s257 + $0x38] sm:$0xff]
    %v266 = vld [vmem:[%s257 + $0x40] sm:$0x1]
    %v268 = vsel %vm62, %v254, 0
    %270 = vmatprep.subr.mxu0 0.0
    %271 = vmatpush1.msra.mxu0 %v262
    %272 = vmatprep.subr.mxu0 0.0
    %273 = vmatpush1.msra.mxu0 %v263
    %274 = vmatprep.subr.mxu0 0.0
    %275 = vmatpush1.msra.mxu0 %v264
    %276 = vmatprep.subr.mxu0 0.0
    %277 = vmatpush1.msra.mxu0 %v265
    %278 = vmatprep.subr.mxu0 0.0
    %279 = vmatpush1.msra.mxu0 0.0
    %280 = vmatprep.subr.mxu0 0.0
    %281 = vmatpush1.msra.mxu0 0.0
    %282 = vmatprep.subr.mxu0 0.0
    %283 = vmatpush1.msra.mxu0 0.0
    %284 = vmatprep.subr.mxu0 0.0
    %285 = vmatpush1.msra.mxu0 0.0
    %286 = vmatprep.subr.mxu0 0.0
    %287 = vmatpush1.msra.mxu0 0.0
    %288 = vmatprep.subr.mxu0 0.0
    %289 = vmatpush1.msra.mxu0 0.0
    %290 = vmatprep.subr.mxu0 0.0
    %291 = vmatpush1.msra.mxu0 0.0
    %292 = vmatprep.subr.mxu0 0.0
    %293 = vmatpush1.msra.mxu0 0.0
    %294 = vmatprep.subr.mxu0 0.0
    %295 = vmatpush1.msra.mxu0 0.0
    %296 = vmatprep.subr.mxu0 0.0
    %297 = vmatpush1.msra.mxu0 0.0
    %298 = vmatprep.subr.mxu0 0.0
    %299 = vmatpush1.msra.mxu0 0.0
    %300 = vmatprep.subr.mxu0 0.0
    %301 = vmatpush1.msra.mxu0 0.0
    %302 = vmatprep.subr.mxu0 0.0
    %303 = vmatpush1.msra.mxu0 0.0
    %304 = vmatprep.subr.mxu0 0.0
    %305 = vmatpush1.msra.mxu0 0.0
    %306 = vmatprep.subr.mxu0 0.0
    %307 = vmatpush1.msra.mxu0 0.0
    %308 = vmatprep.subr.mxu0 0.0
    %309 = vmatpush1.msra.mxu0 0.0
    %310 = vmatprep.subr.mxu0 0.0
    %311 = vmatpush1.msra.mxu0 0.0
    %312 = vmatprep.subr.mxu0 0.0
    %313 = vmatpush1.msra.mxu0 0.0
    %314 = vmatprep.subr.mxu0 0.0
    %315 = vmatpush1.msra.mxu0 0.0
    %316 = vmatprep.subr.mxu0 0.0
    %317 = vmatpush1.msra.mxu0 0.0
    %318 = vmatprep.subr.mxu0 0.0
    %319 = vmatpush1.msra.mxu0 0.0
    %320 = vmatprep.subr.mxu0 0.0
    %321 = vmatpush1.msra.mxu0 0.0
    %322 = vmatprep.subr.mxu0 0.0
    %323 = vmatpush1.msra.mxu0 0.0
    %324 = vmatprep.subr.mxu0 0.0
    %325 = vmatpush1.msra.mxu0 0.0
    %326 = vmatprep.subr.mxu0 0.0
    %327 = vmatpush1.msra.mxu0 0.0
    %328 = vmatprep.subr.mxu0 0.0
    %329 = vmatpush1.msra.mxu0 0.0
    %330 = vmatprep.subr.mxu0 0.0
    %331 = vmatpush1.msra.mxu0 0.0
    %332 = vmatprep.subr.mxu0 0.0
    %333 = vmatpush1.msra.mxu0 0.0
    %334 = vmatprep.mubr.f32.mxu0 0.0
    %335 = vmatmul.mubr.f32.gmra.mrb[0].mxu0 %v268
    %v336 = vpop.f32.mrb[0].mxu0
    %v337 = vadd.f32 0.0, %v336
    %v338 = vpop.f32.mrb[0].mxu0
    %339 = vdwg.mxu0
    %v340 = vsel %vm62, %v244, 0
    %342 = vmatprep.subr.mxu0 0.0
    %343 = vmatpush1.msra.mxu0 %v258
    %344 = vmatprep.subr.mxu0 0.0
    %345 = vmatpush1.msra.mxu0 %v259
    %346 = vmatprep.subr.mxu0 0.0
    %347 = vmatpush1.msra.mxu0 %v260
    %348 = vmatprep.subr.mxu0 0.0
    %349 = vmatpush1.msra.mxu0 %v261
    %350 = vmatprep.subr.mxu0 0.0
    %351 = vmatpush1.msra.mxu0 0.0
    %352 = vmatprep.subr.mxu0 0.0
    %353 = vmatpush1.msra.mxu0 0.0
    %354 = vmatprep.subr.mxu0 0.0
    %355 = vmatpush1.msra.mxu0 0.0
    %356 = vmatprep.subr.mxu0 0.0
    %357 = vmatpush1.msra.mxu0 0.0
    %358 = vmatprep.subr.mxu0 0.0
    %359 = vmatpush1.msra.mxu0 0.0
    %360 = vmatprep.subr.mxu0 0.0
    %361 = vmatpush1.msra.mxu0 0.0
    %362 = vmatprep.subr.mxu0 0.0
    %363 = vmatpush1.msra.mxu0 0.0
    %364 = vmatprep.subr.mxu0 0.0
    %365 = vmatpush1.msra.mxu0 0.0
    %366 = vmatprep.subr.mxu0 0.0
    %367 = vmatpush1.msra.mxu0 0.0
    %368 = vmatprep.subr.mxu0 0.0
    %369 = vmatpush1.msra.mxu0 0.0
    %370 = vmatprep.subr.mxu0 0.0
    %371 = vmatpush1.msra.mxu0 0.0
    %372 = vmatprep.subr.mxu0 0.0
    %373 = vmatpush1.msra.mxu0 0.0
    %374 = vmatprep.subr.mxu0 0.0
    %375 = vmatpush1.msra.mxu0 0.0
    %376 = vmatprep.subr.mxu0 0.0
    %377 = vmatpush1.msra.mxu0 0.0
    %378 = vmatprep.subr.mxu0 0.0
    %379 = vmatpush1.msra.mxu0 0.0
    %380 = vmatprep.subr.mxu0 0.0
    %381 = vmatpush1.msra.mxu0 0.0
    %382 = vmatprep.subr.mxu0 0.0
    %383 = vmatpush1.msra.mxu0 0.0
    %384 = vmatprep.subr.mxu0 0.0
    %385 = vmatpush1.msra.mxu0 0.0
    %386 = vmatprep.subr.mxu0 0.0
    %387 = vmatpush1.msra.mxu0 0.0
    %388 = vmatprep.subr.mxu0 0.0
    %389 = vmatpush1.msra.mxu0 0.0
    %390 = vmatprep.subr.mxu0 0.0
    %391 = vmatpush1.msra.mxu0 0.0
    %392 = vmatprep.subr.mxu0 0.0
    %393 = vmatpush1.msra.mxu0 0.0
    %394 = vmatprep.subr.mxu0 0.0
    %395 = vmatpush1.msra.mxu0 0.0
    %396 = vmatprep.subr.mxu0 0.0
    %397 = vmatpush1.msra.mxu0 0.0
    %398 = vmatprep.subr.mxu0 0.0
    %399 = vmatpush1.msra.mxu0 0.0
    %400 = vmatprep.subr.mxu0 0.0
    %401 = vmatpush1.msra.mxu0 0.0
    %402 = vmatprep.subr.mxu0 0.0
    %403 = vmatpush1.msra.mxu0 0.0
    %404 = vmatprep.subr.mxu0 0.0
    %405 = vmatpush1.msra.mxu0 0.0
    %406 = vmatprep.mubr.f32.mxu0 0.0
    %407 = vmatmul.mubr.f32.gmra.mrb[0].mxu0 %v340
    %v408 = vpop.f32.mrb[0].mxu0
    %v409 = vadd.f32 %v337, %v408
    %v410 = vpop.f32.mrb[0].mxu0
    %411 = vdwg.mxu0
    %v412 = vlaneseq
    %v413 = vshrl.u32 %v412, 7
    %v414 = vsub.s32 0, %v413
    %v415 = vrot.slane %v266, %v414
    %v416 = vadd.f32 %v409, %v415
    %v417 = vxor.u32 %v416, 2147483648
    %v418 = vmul.f32 %v417, 1.442695
    %v419 = vpow.pop %v418
    %v420 = vadd.f32 %v419, 1.0
    %v421 = vrcp.pop %v420
    %v422 = vmul.f32 1.0, %v421
    %v423 = vtanh.pop %v416
    %425 = vrot.lane.b32.xlu0 %v256, 32
    %v426 = vpop.permute.xlu0 %425
    %v428 = vmul.f32 %v422, %v426
    %430 = vrot.lane.b32.xlu0 %v423, 64
    %v431 = vpop.permute.xlu0 %430
    %v433 = vmul.f32 %v422, %v431
    %435 = vrot.lane.b32.xlu0 %v433, 32
    %v436 = vpop.permute.xlu0 %435
    %v438 = vadd.f32 %v428, %v436
    %v439 = vtanh.pop %v438
    %441 = vrot.lane.b32.xlu0 %v439, 64
    %v442 = vpop.permute.xlu0 %441
    %v444 = vmul.f32 %v422, %v442
    %446 = vrot.lane.b32.xlu0 %v444, 32
    %v447 = vpop.permute.xlu0 %446
    %s449 = scalar_lea.vmem %s7, 2
    %450 = vst.msk [vmem:[%s449] sm:$0x3] %vm246, %v447
    %452 = vrot.lane.b32.xlu0 %v438, 96
    %v453 = vpop.permute.xlu0 %452
    %s455 = scalar_lea.vmem %s8, 2
    %456 = vst.msk [vmem:[%s455] sm:$0x3] %vm246, %v453
    %v457 = vld [vmem:[%s5] sm:$0xff]
    %v458 = vld [vmem:[%s5 + $0x8] sm:$0xff]
    %v459 = vld [vmem:[%s5 + $0x10] sm:$0xff]
    %v460 = vld [vmem:[%s5 + $0x18] sm:$0xff]
    %v461 = vld [vmem:[%s5 + $0x20] sm:$0x1]
    %v462 = vlaneseq
    %v463 = vshrl.u32 %v462, 7
    %v464 = vsub.s32 0, %v463
    %v465 = vrot.slane %v461, %v464
    %v466 = vsel %vm62, %v447, 0
    %468 = vmatprep.subr.mxu0 0.0
    %469 = vmatpush1.msra.mxu0 %v457
    %470 = vmatprep.subr.mxu0 0.0
    %471 = vmatpush1.msra.mxu0 %v458
    %472 = vmatprep.subr.mxu0 0.0
    %473 = vmatpush1.msra.mxu0 %v459
    %474 = vmatprep.subr.mxu0 0.0
    %475 = vmatpush1.msra.mxu0 %v460
    %476 = vmatprep.subr.mxu0 0.0
    %477 = vmatpush1.msra.mxu0 0.0
    %478 = vmatprep.subr.mxu0 0.0
    %479 = vmatpush1.msra.mxu0 0.0
    %480 = vmatprep.subr.mxu0 0.0
    %481 = vmatpush1.msra.mxu0 0.0
    %482 = vmatprep.subr.mxu0 0.0
    %483 = vmatpush1.msra.mxu0 0.0
    %484 = vmatprep.subr.mxu0 0.0
    %485 = vmatpush1.msra.mxu0 0.0
    %486 = vmatprep.subr.mxu0 0.0
    %487 = vmatpush1.msra.mxu0 0.0
    %488 = vmatprep.subr.mxu0 0.0
    %489 = vmatpush1.msra.mxu0 0.0
    %490 = vmatprep.subr.mxu0 0.0
    %491 = vmatpush1.msra.mxu0 0.0
    %492 = vmatprep.subr.mxu0 0.0
    %493 = vmatpush1.msra.mxu0 0.0
    %494 = vmatprep.subr.mxu0 0.0
    %495 = vmatpush1.msra.mxu0 0.0
    %496 = vmatprep.subr.mxu0 0.0
    %497 = vmatpush1.msra.mxu0 0.0
    %498 = vmatprep.subr.mxu0 0.0
    %499 = vmatpush1.msra.mxu0 0.0
    %500 = vmatprep.subr.mxu0 0.0
    %501 = vmatpush1.msra.mxu0 0.0
    %502 = vmatprep.subr.mxu0 0.0
    %503 = vmatpush1.msra.mxu0 0.0
    %504 = vmatprep.subr.mxu0 0.0
    %505 = vmatpush1.msra.mxu0 0.0
    %506 = vmatprep.subr.mxu0 0.0
    %507 = vmatpush1.msra.mxu0 0.0
    %508 = vmatprep.subr.mxu0 0.0
    %509 = vmatpush1.msra.mxu0 0.0
    %510 = vmatprep.subr.mxu0 0.0
    %511 = vmatpush1.msra.mxu0 0.0
    %512 = vmatprep.subr.mxu0 0.0
    %513 = vmatpush1.msra.mxu0 0.0
    %514 = vmatprep.subr.mxu0 0.0
    %515 = vmatpush1.msra.mxu0 0.0
    %516 = vmatprep.subr.mxu0 0.0
    %517 = vmatpush1.msra.mxu0 0.0
    %518 = vmatprep.subr.mxu0 0.0
    %519 = vmatpush1.msra.mxu0 0.0
    %520 = vmatprep.subr.mxu0 0.0
    %521 = vmatpush1.msra.mxu0 0.0
    %522 = vmatprep.subr.mxu0 0.0
    %523 = vmatpush1.msra.mxu0 0.0
    %524 = vmatprep.subr.mxu0 0.0
    %525 = vmatpush1.msra.mxu0 0.0
    %526 = vmatprep.subr.mxu0 0.0
    %527 = vmatpush1.msra.mxu0 0.0
    %528 = vmatprep.subr.mxu0 0.0
    %529 = vmatpush1.msra.mxu0 0.0
    %530 = vmatprep.subr.mxu0 0.0
    %531 = vmatpush1.msra.mxu0 0.0
    %532 = vmatprep.mubr.f32.mxu0 0.0
    %533 = vmatmul.mubr.f32.gmra.mrb[0].mxu0 %v466
    %v534 = vpop.f32.mrb[0].mxu0
    %v535 = vadd.f32 %v465, %v534
    %v536 = vpop.f32.mrb[0].mxu0
    %537 = vdwg.mxu0
    %538 = vst [vmem:[#allocation5] sm:$0x3] %v535
    // Predicated region
    $region30: #{decoder_forward.1} parent=1 // pred_check
      _
    $region31: #{decoder_forward.1} parent=1 // pred_check_branch
      %540 = sbr.rel (0) target = $region33
    $region32: #{decoder_forward.1} parent=1 // pred_region
      %s542 = ssub.s32 32, 32
      %543 = vsyncadd [#allocation3], %s542
      %s545 = sshll.u32 [#allocation5], 4
      %s546 = int_to_ptr.vmem [resolvable:$true] %s545
      %548 = dma.vmem_to_hbm [thread:$0]  %s546, 32, %s6, [#allocation3]
    $region33: #{decoder_forward.1} parent=1 // pred_fallthru
      _
    // Predicated region
    $region34: #{decoder_forward.1} parent=1 // pred_check
      _
    $region35: #{decoder_forward.1} parent=1 // pred_check_branch
      %550 = sbr.rel (0) target = $region37
    $region36: #{decoder_forward.1} parent=1 // pred_region
      _
    $region37: #{decoder_forward.1} parent=1 // pred_fallthru
      _
    // Predicated region
    $region38: #{decoder_forward.1} parent=1 // pred_check
      _
    $region39: #{decoder_forward.1} parent=1 // pred_check_branch
      %552 = sbr.rel (0) target = $region41
    $region40: #{decoder_forward.1} parent=1 // pred_region
      _
    $region41: #{decoder_forward.1} parent=1 // pred_fallthru
      _
    // Predicated region
    $region42: #{decoder_forward.1} parent=1 // pred_check
      _
    $region43: #{decoder_forward.1} parent=1 // pred_check_branch
      %554 = sbr.rel (0) target = $region45
    $region44: #{decoder_forward.1} parent=1 // pred_region
      %555 = dma.done [#allocation3], 32
    $region45: #{decoder_forward.1} parent=1 // pred_fallthru
      _
    // Predicated region
    $region46: #{decoder_forward.1} parent=1 // pred_check
      _
    $region47: #{decoder_forward.1} parent=1 // pred_check_branch
      %557 = sbr.rel (0) target = $region49
    $region48: #{decoder_forward.1} parent=1 // pred_region
      _
    $region49: #{decoder_forward.1} parent=1 // pred_fallthru
      _
    // Predicated region
    $region50: #{decoder_forward.1} parent=1 // pred_check
      _
    $region51: #{decoder_forward.1} parent=1 // pred_check_branch
      %559 = sbr.rel (0) target = $region53
    $region52: #{decoder_forward.1} parent=1 // pred_region
      _
    $region53: #{decoder_forward.1} parent=1 // pred_fallthru
      _
    %560 = vsyncpa [#allocation3], 1
    %561 = vsyncpa [#allocation4], 1

</llo_original>
